<compile_context>
chip_gen: v7x
topology: tpu7x:2x2x1
jax: 0.10.0
libtpu: 0.0.40
codegen_flags: <defaults>
</compile_context>

<pallas_src>
import functools

import jax
import jax.numpy as jnp
import numpy as np
from jax.experimental import pallas as pl
from jax.experimental.pallas import tpu as pltpu


# ----------------------------------------------------------------------------
# Small helpers
# ----------------------------------------------------------------------------
def _num_tensorcores():
    """Best-effort TensorCore count a single Pallas grid can be sharded over."""
    try:
        kind = jax.devices()[0].device_kind.lower()
    except Exception:
        return 1
    # v7x has 2 TCs/chip; v3/v4 megacore also expose 2.  v5e/v6e are single-TC.
    return 2 if any(tag in kind for tag in ("v7", "v4", "v3")) else 1


def _largest_divisor_le(n, cap):
    cap = max(1, min(n, cap))
    for d in range(cap, 0, -1):
        if n % d == 0:
            return d
    return 1


def _itemsize(dtype):
    return np.dtype(dtype).itemsize


def _vmem_limit_bytes(io_elems, io_itemsize, w_elems, w_itemsize, interm_elems):
    # double-buffered I/O blocks + resident weights + f32 temporaries,
    # 2x headroom + 2 MiB slack; clamp to [8 MiB, 64 MiB] (v7x VMEM = 64 MiB/TC).
    total = 2 * io_elems * io_itemsize + 2 * w_elems * w_itemsize + 4 * interm_elems
    total = 2 * total + (2 << 20)
    return int(min(max(total, 8 << 20), 64 << 20))


def _pick_spatial_tile(hw, max_tile):
    if hw < 256:
        return hw                       # single full-extent block (any width allowed)
    return max(128, (min(max_tile, hw) // 128) * 128)


# ----------------------------------------------------------------------------
# Kernel A (NCHW path): o[b] = W2T @ relu(W1T @ x[b] + b1) + b2 on (cin, t) tiles
# with the spatial axis lane-dense.  `bblk` batch images per grid step.
# ----------------------------------------------------------------------------
def _mlp_cols_kernel(x_ref, w1t_ref, b1_ref, w2t_ref, b2_ref, o_ref, *,
                     bblk, matmul_dtype):
    w1t = w1t_ref[...]
    w2t = w2t_ref[...]
    b1 = b1_ref[...]
    b2 = b2_ref[...]
    for bi in range(bblk):                                     # static unroll, bblk <= 8
        x = x_ref[bi].astype(matmul_dtype)                     # (cin, t), lanes = spatial
        h = jnp.dot(w1t, x, preferred_element_type=jnp.float32)        # (hidden, t)
        h = jnp.maximum(h + b1, 0.0)                           # bias + ReLU in f32
        y = jnp.dot(w2t, h.astype(matmul_dtype),
                    preferred_element_type=jnp.float32)        # (cout, t)
        o_ref[bi] = (y + b2).astype(o_ref.dtype)               # lane-dense store


def _fused_mlp_cols(x3, w1t, b1, w2t, b2, *, matmul_dtype, max_tile=4096):
    """x3: (B, Cin, HW) -> (B, Cout, HW) via one fused Pallas kernel."""
    B, cin, hw = x3.shape
    hidden = w1t.shape[0]
    cout = w2t.shape[0]
    mm_dtype = matmul_dtype if matmul_dtype is not None else x3.dtype

    w1t_c = w1t.astype(mm_dtype)
    w2t_c = w2t.astype(mm_dtype)
    b1c = b1.astype(jnp.float32).reshape(hidden, 1)
    b2c = b2.astype(jnp.float32).reshape(cout, 1)

    num_cores = _num_tensorcores()
    t = _pick_spatial_tile(hw, max_tile)
    spatial_steps = pl.cdiv(hw, t)

    # Megacore (v7x/v3/v4): guarantee >= 2 parallel grid steps when B == 1.
    if num_cores >= 2 and B == 1 and spatial_steps == 1 and hw >= 256:
        t = max(128, (((hw + 1) // 2) + 127) // 128 * 128)
        spatial_steps = pl.cdiv(hw, t)

    # Small-spatial / large-batch: fold several batch images per grid step.
    # Keep >= num_cores total steps so megacore chips still split the grid.
    bblk = 1
    if spatial_steps == 1 and B > 1:
        bblk = _largest_divisor_le(B, min(8, max(1, B // num_cores)))
    grid = (B // bblk, spatial_steps)

    io_elems = bblk * (cin + cout) * t
    w_elems = hidden * cin + cout * hidden + hidden + cout
    interm_elems = bblk * (cin + 2 * hidden + cout) * t
    vmem_limit = _vmem_limit_bytes(io_elems, x3.dtype.itemsize,
                                   w_elems, _itemsize(mm_dtype), interm_elems)

    flops = 2 * B * hw * (cin * hidden + hidden * cout)
    bytes_accessed = (x3.size * x3.dtype.itemsize
                      + B * cout * hw * x3.dtype.itemsize
                      + (w1t_c.size + w2t_c.size) * _itemsize(mm_dtype)
                      + (hidden + cout) * 4)

    kernel = functools.partial(_mlp_cols_kernel, bblk=bblk, matmul_dtype=mm_dtype)
    return pl.pallas_call(
        kernel,
        out_shape=jax.ShapeDtypeStruct((B, cout, hw), x3.dtype),
        grid=grid,
        in_specs=[
            pl.BlockSpec((bblk, cin, t), lambda b, i: (b, 0, i)),     # x tile
            pl.BlockSpec((hidden, cin), lambda b, i: (0, 0)),         # W1T (resident)
            pl.BlockSpec((hidden, 1), lambda b, i: (0, 0)),           # b1
            pl.BlockSpec((cout, hidden), lambda b, i: (0, 0)),        # W2T (resident)
            pl.BlockSpec((cout, 1), lambda b, i: (0, 0)),             # b2
        ],
        out_specs=pl.BlockSpec((bblk, cout, t), lambda b, i: (b, 0, i)),
        compiler_params=pltpu.CompilerParams(
            dimension_semantics=("parallel", "parallel"),
            vmem_limit_bytes=vmem_limit),
        cost_estimate=pl.CostEstimate(
            flops=flops, transcendentals=0, bytes_accessed=bytes_accessed),
    )(x3, w1t_c, b1c, w2t_c, b2c)


# ----------------------------------------------------------------------------
# Kernel B ((B, L, C) path): layout-native rows kernel, no wrapper transposes.
#   o = relu(x @ W1 + b1) @ W2 + b2   with channels on the lane axis.
# ----------------------------------------------------------------------------
def _mlp_rows_kernel(x_ref, w1_ref, b1_ref, w2_ref, b2_ref, o_ref, *, matmul_dtype):
    x = x_ref[0].astype(matmul_dtype)                                  # (tL, cin)
    h = jnp.dot(x, w1_ref[...], preferred_element_type=jnp.float32)    # (tL, hidden)
    h = jnp.maximum(h + b1_ref[...], 0.0)
    y = jnp.dot(h.astype(matmul_dtype), w2_ref[...],
                preferred_element_type=jnp.float32)                    # (tL, cout)
    o_ref[0] = (y + b2_ref[...]).astype(o_ref.dtype)


def _fused_mlp_rows(x3, w1t, b1, w2t, b2, *, matmul_dtype, max_rows=512):
    """x3: (B, L, Cin) -> (B, L, Cout), channels-last, no extra HBM round trips."""
    B, L, cin = x3.shape
    hidden = w1t.shape[0]
    cout = w2t.shape[0]
    mm_dtype = matmul_dtype if matmul_dtype is not None else x3.dtype

    w1r = jnp.transpose(w1t).astype(mm_dtype)      # (cin, hidden)  -- tiny
    w2r = jnp.transpose(w2t).astype(mm_dtype)      # (hidden, cout) -- tiny
    b1r = b1.astype(jnp.float32).reshape(1, hidden)
    b2r = b2.astype(jnp.float32).reshape(1, cout)

    tL = L if L <= max_rows else (max_rows // 8) * 8
    grid = (B, pl.cdiv(L, tL))

    io_elems = tL * (cin + cout)
    w_elems = hidden * cin + cout * hidden + hidden + cout
    interm_elems = tL * (cin + 2 * hidden + cout)
    vmem_limit = _vmem_limit_bytes(io_elems, x3.dtype.itemsize,
                                   w_elems, _itemsize(mm_dtype), interm_elems)

    flops = 2 * B * L * (cin * hidden + hidden * cout)
    bytes_accessed = (x3.size * x3.dtype.itemsize
                      + B * L * cout * x3.dtype.itemsize
                      + (w1r.size + w2r.size) * _itemsize(mm_dtype)
                      + (hidden + cout) * 4)

    kernel = functools.partial(_mlp_rows_kernel, matmul_dtype=mm_dtype)
    return pl.pallas_call(
        kernel,
        out_shape=jax.ShapeDtypeStruct((B, L, cout), x3.dtype),
        grid=grid,
        in_specs=[
            pl.BlockSpec((1, tL, cin), lambda b, i: (b, i, 0)),       # x tile
            pl.BlockSpec((cin, hidden), lambda b, i: (0, 0)),         # W1  (resident)
            pl.BlockSpec((1, hidden), lambda b, i: (0, 0)),           # b1
            pl.BlockSpec((hidden, cout), lambda b, i: (0, 0)),        # W2  (resident)
            pl.BlockSpec((1, cout), lambda b, i: (0, 0)),             # b2
        ],
        out_specs=pl.BlockSpec((1, tL, cout), lambda b, i: (b, i, 0)),
        compiler_params=pltpu.CompilerParams(
            dimension_semantics=("parallel", "parallel"),
            vmem_limit_bytes=vmem_limit),
        cost_estimate=pl.CostEstimate(
            flops=flops, transcendentals=0, bytes_accessed=bytes_accessed),
    )(x3, w1r, b1r, w2r, b2r)


# ----------------------------------------------------------------------------
# Exact dense fold of grouped conv weights + channel_shuffle (vectorized).
#   w1: (hidden, cin//g)  -> W1T (hidden, cin)   block-diagonal
#   w2: (out,   hidden//g)-> W2T (out, hidden)   block-diagonal, columns permuted
#                            by the inverse channel_shuffle
# Hoist this out of the per-step forward (done once in __main__).
# ----------------------------------------------------------------------------
def fold_group_weights(w1, w2, groups):
    hidden, cin_g = w1.shape
    out_f, hid_g = w2.shape
    cin = cin_g * groups
    cout_g = out_f // groups

    eye1 = jnp.eye(groups, dtype=w1.dtype)
    # W1T[g*hid_g + j, G*cin_g + k] = w1[g*hid_g + j, k] * (g == G)
    w1t = jnp.einsum("ghk,gG->ghGk", w1.reshape(groups, hid_g, cin_g), eye1)
    w1t = w1t.reshape(hidden, cin)

    # fc2 on *shuffled* hidden channels: block-diagonal in shuffled index s
    eye2 = jnp.eye(groups, dtype=w2.dtype)
    w2t_shuf = jnp.einsum("goj,gG->goGj", w2.reshape(groups, cout_g, hid_g), eye2)
    w2t_shuf = w2t_shuf.reshape(out_f, hidden)
    # channel_shuffle: unshuffled k = c*groups + g  <->  shuffled s = g*hid_g + c
    # Permute columns so the kernel consumes the *unshuffled* activations.
    w2t = (w2t_shuf.reshape(out_f, groups, hid_g)
           .transpose(0, 2, 1)
           .reshape(out_f, hidden))
    return w1t, w2t


# ----------------------------------------------------------------------------
# GroupConvMlp forward (pre-folded dense weights).
#   NCHW in / NCHW out, or (B, L, C) like the torch module's 3-D branch.
#   norm=Identity and drop=0.0 in this config -> no-ops.
# ----------------------------------------------------------------------------
def group_conv_mlp_forward(x, w1t, b1, w2t, b2, *,
                           matmul_dtype=jnp.bfloat16, max_tile=4096):
    if x.ndim == 3:
        return _fused_mlp_rows(x, w1t, b1, w2t, b2, matmul_dtype=matmul_dtype)
    B, C, H, W = x.shape
    cout = w2t.shape[0]
    x3 = x.reshape(B, C, H * W)                      # free view, H*W is the fast axis
    y3 = _fused_mlp_cols(x3, w1t, b1, w2t, b2,
                         matmul_dtype=matmul_dtype, max_tile=max_tile)
    return y3.reshape(B, cout, H, W)


def group_conv_mlp_forward_grouped(x, w1, b1, w2, b2, groups, **kw):
    """Convenience wrapper taking raw grouped conv weights (fold done inline)."""
    w1t, w2t = fold_group_weights(w1, w2, groups)
    return group_conv_mlp_forward(x, w1t, b1, w2t, b2, **kw)


# ----------------------------------------------------------------------------
# Pure-JAX reference (mirrors the torch module op-for-op) for verification
# ----------------------------------------------------------------------------
def reference_forward(x, w1, b1, w2, b2, groups):
    B, C, H, W = x.shape
    hidden = w1.shape[0]
    out_f = w2.shape[0]
    cin_g, hid_g, cout_g = C // groups, hidden // groups, out_f // groups

    h_parts = []
    for gi in range(groups):
        xg = x[:, gi * cin_g:(gi + 1) * cin_g]
        wg = w1[gi * hid_g:(gi + 1) * hid_g]
        hg = jnp.einsum("bchw,oc->bohw", xg, wg) \
            + b1[gi * hid_g:(gi + 1) * hid_g][None, :, None, None]
        h_parts.append(hg)
    h = jnp.concatenate(h_parts, axis=1)
    h = jnp.maximum(h, 0.0)
    # channel_shuffle
    h = h.reshape(B, hidden // groups, groups, H, W)
    h = jnp.transpose(h, (0, 2, 1, 3, 4)).reshape(B, hidden, H, W)
    y_parts = []
    for gi in range(groups):
        hg = h[:, gi * hid_g:(gi + 1) * hid_g]
        wg = w2[gi * cout_g:(gi + 1) * cout_g]
        yg = jnp.einsum("bchw,oc->bohw", hg, wg) \
            + b2[gi * cout_g:(gi + 1) * cout_g][None, :, None, None]
        y_parts.append(yg)
    return jnp.concatenate(y_parts, axis=1)


if __name__ == "__main__":
    # Module config: in_features=4, hidden_features=32, out_features=4, groups=2,
    # act=ReLU, norm=None (Identity), drop=0.0 (identity).
    in_features = 4
    hidden_features = 32
    out_features = 4
    groups = 2
    B, H, W = 2, 16, 16

    key = jax.random.PRNGKey(0)
    kx, kw1, kb1, kw2, kb2 = jax.random.split(key, 5)

    x = jax.random.normal(kx, (B, in_features, H, W), dtype=jnp.float32)
    # Conv2d(in, hidden, 1, groups=g) weight: (hidden, in//g, 1, 1) -> squeeze k dims
    w1 = jax.random.normal(kw1, (hidden_features, in_features // groups),
                           dtype=jnp.float32) * 0.1
    b1 = jax.random.normal(kb1, (hidden_features,), dtype=jnp.float32) * 0.1
    w2 = jax.random.normal(kw2, (out_features, hidden_features // groups),
                           dtype=jnp.float32) * 0.1
    b2 = jax.random.normal(kb2, (out_features,), dtype=jnp.float32) * 0.1

    y_ref = jax.block_until_ready(reference_forward(x, w1, b1, w2, b2, groups))

    # Fold grouped weights + channel_shuffle ONCE (hoisted out of the jitted step).
    w1t, w2t = fold_group_weights(w1, w2, groups)
    w1t = jax.block_until_ready(w1t)
    w2t = jax.block_until_ready(w2t)

    # Default path: bf16 MXU operands, f32 accumulation.
    fwd = jax.jit(group_conv_mlp_forward)
    y = jax.block_until_ready(fwd(x, w1t, b1, w2t, b2))
    assert y.shape == (B, out_features, H, W), y.shape
    assert jnp.allclose(y, y_ref, atol=5e-2, rtol=5e-2), \
        float(jnp.max(jnp.abs(y - y_ref)))

    # Opt-out f32-operand path (exact).
    fwd_f32 = jax.jit(functools.partial(group_conv_mlp_forward,
                                        matmul_dtype=jnp.float32))
    y32 = jax.block_until_ready(fwd_f32(x, w1t, b1, w2t, b2))
    assert jnp.allclose(y32, y_ref, atol=1e-4, rtol=1e-4), \
        float(jnp.max(jnp.abs(y32 - y_ref)))

    # (B, L, C) input path: layout-native rows kernel, no wrapper transposes.
    L = 8
    x3d = jax.random.normal(kx, (B, L, in_features), dtype=jnp.float32)
    y3d = jax.block_until_ready(fwd_f32(x3d, w1t, b1, w2t, b2))
    x3d_as4d = jnp.transpose(x3d, (0, 2, 1))[..., None]
    y3d_ref = jnp.transpose(
        reference_forward(x3d_as4d, w1, b1, w2, b2, groups)[..., 0], (0, 2, 1))
    assert y3d.shape == (B, L, out_features), y3d.shape
    assert jnp.allclose(y3d, y3d_ref, atol=1e-4, rtol=1e-4), \
        float(jnp.max(jnp.abs(y3d - y3d_ref)))

    # bf16 path on the 3-D branch too (loose tolerance).
    y3d_bf16 = jax.block_until_ready(fwd(x3d, w1t, b1, w2t, b2))
    assert jnp.allclose(y3d_bf16, y3d_ref, atol=5e-2, rtol=5e-2), \
        float(jnp.max(jnp.abs(y3d_bf16 - y3d_ref)))

    print("KERNEL_OK")
</pallas_src>

<mosaic_0001>
module attributes {stable_mosaic.version = 11 : i64} {
  func.func @_mlp_cols_kernel(%arg0: i32, %arg1: i32, %arg2: memref<2x4x256xf32, #tpu.memory_space<vmem>>, %arg3: memref<32x4xbf16, #tpu.memory_space<vmem>>, %arg4: memref<32x1xf32, #tpu.memory_space<vmem>>, %arg5: memref<4x32xbf16, #tpu.memory_space<vmem>>, %arg6: memref<4x1xf32, #tpu.memory_space<vmem>>, %arg7: memref<2x4x256xf32, #tpu.memory_space<vmem>>) attributes {dimension_semantics = [#tpu.dimension_semantics<parallel>, #tpu.dimension_semantics<parallel>], iteration_bounds = array<i64: 1, 1>, scalar_prefetch = 0 : i64, scratch_operands = 0 : i64, tpu.core_type = #tpu.core_type<tc>, window_params = [{transform_indices = @transform_0, window_bounds = array<i64: 2, 4, 256>}, {pipeline_mode = #tpu.pipeline_mode<synchronous>, transform_indices = @transform_1, window_bounds = array<i64: 32, 4>}, {pipeline_mode = #tpu.pipeline_mode<synchronous>, transform_indices = @transform_2, window_bounds = array<i64: 32, 1>}, {pipeline_mode = #tpu.pipeline_mode<synchronous>, transform_indices = @transform_3, window_bounds = array<i64: 4, 32>}, {pipeline_mode = #tpu.pipeline_mode<synchronous>, transform_indices = @transform_4, window_bounds = array<i64: 4, 1>}, {transform_indices = @transform_5, window_bounds = array<i64: 2, 4, 256>}]} {
    %c0 = arith.constant 0 : index
    %c0_0 = arith.constant 0 : index
    %0 = vector.load %arg3[%c0, %c0_0] : memref<32x4xbf16, #tpu.memory_space<vmem>>, vector<32x4xbf16>
    %c0_1 = arith.constant 0 : index
    %c0_2 = arith.constant 0 : index
    %1 = vector.load %arg5[%c0_1, %c0_2] : memref<4x32xbf16, #tpu.memory_space<vmem>>, vector<4x32xbf16>
    %c0_3 = arith.constant 0 : index
    %c0_4 = arith.constant 0 : index
    %2 = vector.load %arg4[%c0_3, %c0_4] : memref<32x1xf32, #tpu.memory_space<vmem>>, vector<32x1xf32>
    %c0_5 = arith.constant 0 : index
    %c0_6 = arith.constant 0 : index
    %3 = vector.load %arg6[%c0_5, %c0_6] : memref<4x1xf32, #tpu.memory_space<vmem>>, vector<4x1xf32>
    %c0_7 = arith.constant 0 : index
    %c0_8 = arith.constant 0 : index
    %c0_9 = arith.constant 0 : index
    %4 = vector.load %arg2[%c0_7, %c0_8, %c0_9] : memref<2x4x256xf32, #tpu.memory_space<vmem>>, vector<1x4x256xf32>
    %5 = vector.shape_cast %4 : vector<1x4x256xf32> to vector<4x256xf32>
    %6 = arith.truncf %5 : vector<4x256xf32> to vector<4x256xbf16>
    %cst = arith.constant dense<0.000000e+00> : vector<32x256xf32>
    %7 = tpu.matmul %0, %6, %cst {dimension_numbers = #tpu.dot_dimension_numbers<[1], [0], [0], [1], [0, 0, 1, 1], [], []>} : vector<32x4xbf16>, vector<4x256xbf16>, vector<32x256xf32> -> vector<32x256xf32>
    %8 = vector.broadcast %2 : vector<32x1xf32> to vector<32x256xf32>
    %9 = arith.addf %7, %8 : vector<32x256xf32>
    %cst_10 = arith.constant 0.000000e+00 : f32
    %10 = vector.broadcast %cst_10 : f32 to vector<32x256xf32>
    %11 = arith.maximumf %9, %10 : vector<32x256xf32>
    %12 = arith.truncf %11 : vector<32x256xf32> to vector<32x256xbf16>
    %cst_11 = arith.constant dense<0.000000e+00> : vector<4x256xf32>
    %13 = tpu.matmul %1, %12, %cst_11 {dimension_numbers = #tpu.dot_dimension_numbers<[1], [0], [0], [1], [0, 0, 1, 1], [], []>} : vector<4x32xbf16>, vector<32x256xbf16>, vector<4x256xf32> -> vector<4x256xf32>
    %14 = vector.broadcast %3 : vector<4x1xf32> to vector<4x256xf32>
    %15 = arith.addf %13, %14 : vector<4x256xf32>
    %c0_12 = arith.constant 0 : index
    %c0_13 = arith.constant 0 : index
    %c0_14 = arith.constant 0 : index
    %16 = vector.load %arg7[%c0_12, %c0_13, %c0_14] : memref<2x4x256xf32, #tpu.memory_space<vmem>>, vector<1x4x256xf32>
    %17 = vector.shape_cast %16 : vector<1x4x256xf32> to vector<4x256xf32>
    %18 = vector.shape_cast %15 : vector<4x256xf32> to vector<1x4x256xf32>
    tpu.vector_store %arg7[%c0_12, %c0_13, %c0_14], %18 {strides = array<i32>} : memref<2x4x256xf32, #tpu.memory_space<vmem>>, vector<1x4x256xf32>,
    %c1 = arith.constant 1 : index
    %c0_15 = arith.constant 0 : index
    %c0_16 = arith.constant 0 : index
    %19 = vector.load %arg2[%c1, %c0_15, %c0_16] : memref<2x4x256xf32, #tpu.memory_space<vmem>>, vector<1x4x256xf32>
    %20 = vector.shape_cast %19 : vector<1x4x256xf32> to vector<4x256xf32>
    %21 = arith.truncf %20 : vector<4x256xf32> to vector<4x256xbf16>
    %cst_17 = arith.constant dense<0.000000e+00> : vector<32x256xf32>
    %22 = tpu.matmul %0, %21, %cst_17 {dimension_numbers = #tpu.dot_dimension_numbers<[1], [0], [0], [1], [0, 0, 1, 1], [], []>} : vector<32x4xbf16>, vector<4x256xbf16>, vector<32x256xf32> -> vector<32x256xf32>
    %23 = vector.broadcast %2 : vector<32x1xf32> to vector<32x256xf32>
    %24 = arith.addf %22, %23 : vector<32x256xf32>
    %cst_18 = arith.constant 0.000000e+00 : f32
    %25 = vector.broadcast %cst_18 : f32 to vector<32x256xf32>
    %26 = arith.maximumf %24, %25 : vector<32x256xf32>
    %27 = arith.truncf %26 : vector<32x256xf32> to vector<32x256xbf16>
    %cst_19 = arith.constant dense<0.000000e+00> : vector<4x256xf32>
    %28 = tpu.matmul %1, %27, %cst_19 {dimension_numbers = #tpu.dot_dimension_numbers<[1], [0], [0], [1], [0, 0, 1, 1], [], []>} : vector<4x32xbf16>, vector<32x256xbf16>, vector<4x256xf32> -> vector<4x256xf32>
    %29 = vector.broadcast %3 : vector<4x1xf32> to vector<4x256xf32>
    %30 = arith.addf %28, %29 : vector<4x256xf32>
    %c1_20 = arith.constant 1 : index
    %c0_21 = arith.constant 0 : index
    %c0_22 = arith.constant 0 : index
    %31 = vector.load %arg7[%c1_20, %c0_21, %c0_22] : memref<2x4x256xf32, #tpu.memory_space<vmem>>, vector<1x4x256xf32>
    %32 = vector.shape_cast %31 : vector<1x4x256xf32> to vector<4x256xf32>
    %33 = vector.shape_cast %30 : vector<4x256xf32> to vector<1x4x256xf32>
    tpu.vector_store %arg7[%c1_20, %c0_21, %c0_22], %33 {strides = array<i32>} : memref<2x4x256xf32, #tpu.memory_space<vmem>>, vector<1x4x256xf32>,
    return
  }
  func.func @transform_0(%arg0: i32, %arg1: i32) -> (i32, i32, i32) {
    %c0_i32 = arith.constant 0 : i32
    %c0_i32_0 = arith.constant 0 : i32
    return %arg0, %c0_i32, %arg1 : i32, i32, i32
  }
  func.func @transform_1(%arg0: i32, %arg1: i32) -> (i32, i32) {
    %c0_i32 = arith.constant 0 : i32
    %c0_i32_0 = arith.constant 0 : i32
    %c0_i32_1 = arith.constant 0 : i32
    return %c0_i32, %c0_i32_0 : i32, i32
  }
  func.func @transform_2(%arg0: i32, %arg1: i32) -> (i32, i32) {
    %c0_i32 = arith.constant 0 : i32
    %c0_i32_0 = arith.constant 0 : i32
    %c0_i32_1 = arith.constant 0 : i32
    return %c0_i32, %c0_i32_0 : i32, i32
  }
  func.func @transform_3(%arg0: i32, %arg1: i32) -> (i32, i32) {
    %c0_i32 = arith.constant 0 : i32
    %c0_i32_0 = arith.constant 0 : i32
    %c0_i32_1 = arith.constant 0 : i32
    return %c0_i32, %c0_i32_0 : i32, i32
  }
  func.func @transform_4(%arg0: i32, %arg1: i32) -> (i32, i32) {
    %c0_i32 = arith.constant 0 : i32
    %c0_i32_0 = arith.constant 0 : i32
    %c0_i32_1 = arith.constant 0 : i32
    return %c0_i32, %c0_i32_0 : i32, i32
  }
  func.func @transform_5(%arg0: i32, %arg1: i32) -> (i32, i32, i32) {
    %c0_i32 = arith.constant 0 : i32
    %c0_i32_0 = arith.constant 0 : i32
    return %arg0, %c0_i32, %arg1 : i32, i32, i32
  }
}

</mosaic_0001>

<llo_original>
// kernel: group_conv_mlp_forward.1
$region0: #{group_conv_mlp_forward.1}
  #allocation0 [shape = 'u32[]', space=smem, size = 0x4, offset = 0x4, fixed_abs, tag = 'smem constant byte address 0x4 - core index']
  #allocation1 [shape = 'u32[144,128]{1,0:T(1,128)}', space=vmem, size = 0x12000, scoped, tag = 'internal scratch']
  %s0 = inlined_call_operand.vmem [shape: f32[2,4,256], index: 0, kind: input, shape index: {}]
  %s1 = inlined_call_operand.vmem [shape: bf16[32,4], index: 1, kind: input, shape index: {}]
  %s2 = inlined_call_operand.vmem [shape: f32[32,1], index: 2, kind: input, shape index: {}]
  %s3 = inlined_call_operand.vmem [shape: bf16[4,32], index: 3, kind: input, shape index: {}]
  %s4 = inlined_call_operand.vmem [shape: f32[4,1], index: 4, kind: input, shape index: {}]
  %s5 = inlined_call_operand.vmem [shape: f32[2,4,256], index: 5, kind: output, shape index: {}]
  %s6 = sld [smem:[#allocation0]]
  $region30: #{group_conv_mlp_forward.1} parent=0
    _
  %s8 = ssub.s32 1, %s6
  %s9 = scalar_select 0, %s8, %s6
  // Predicated region
  $region2: #{group_conv_mlp_forward.1} parent=0 // pred_check
    _
  $region3: #{group_conv_mlp_forward.1} parent=0 // pred_check_branch
    %11 = sbr.rel (0) target = $region5
  $region4: #{group_conv_mlp_forward.1} parent=0 // pred_region
    _
  $region5: #{group_conv_mlp_forward.1} parent=0 // pred_fallthru
    _
  // Predicated region
  $region6: #{group_conv_mlp_forward.1} parent=0 // pred_check
    _
  $region7: #{group_conv_mlp_forward.1} parent=0 // pred_check_branch
    %13 = sbr.rel (0) target = $region9
  $region8: #{group_conv_mlp_forward.1} parent=0 // pred_region
    _
  $region9: #{group_conv_mlp_forward.1} parent=0 // pred_fallthru
    _
  // Predicated region
  $region10: #{group_conv_mlp_forward.1} parent=0 // pred_check
    _
  $region11: #{group_conv_mlp_forward.1} parent=0 // pred_check_branch
    %15 = sbr.rel (0) target = $region13
  $region12: #{group_conv_mlp_forward.1} parent=0 // pred_region
    _
  $region13: #{group_conv_mlp_forward.1} parent=0 // pred_fallthru
    _
  // Predicated region
  $region14: #{group_conv_mlp_forward.1} parent=0 // pred_check
    _
  $region15: #{group_conv_mlp_forward.1} parent=0 // pred_check_branch
    %17 = sbr.rel (0) target = $region17
  $region16: #{group_conv_mlp_forward.1} parent=0 // pred_region
    _
  $region17: #{group_conv_mlp_forward.1} parent=0 // pred_fallthru
    _
  // Predicated region
  $region18: #{group_conv_mlp_forward.1} parent=0 // pred_check
    _
  $region19: #{group_conv_mlp_forward.1} parent=0 // pred_check_branch
    %19 = sbr.rel (0) target = $region21
  $region20: #{group_conv_mlp_forward.1} parent=0 // pred_region
    _
  $region21: #{group_conv_mlp_forward.1} parent=0 // pred_fallthru
    _
  %v21 = vld [vmem:[%s1] sm:$0xf]
  %v22 = vld [vmem:[%s1 + $0x4] sm:$0xf]
  %v23 = vld [vmem:[%s1 + $0x8] sm:$0xf]
  %v24 = vld [vmem:[%s1 + $0xc] sm:$0xf]
  %v25 = vld [vmem:[%s3] sm:$0x3]
  %v26 = vld [vmem:[%s2] sm:$0xff]
  %v27 = vld [vmem:[%s2 + $0x8] sm:$0xff]
  %v28 = vld [vmem:[%s2 + $0x10] sm:$0xff]
  %v29 = vld [vmem:[%s2 + $0x18] sm:$0xff]
  %v30 = vld [vmem:[%s4] sm:$0xf]
  %v31 = vld [vmem:[%s0] sm:$0xff]
  %v33 = vcombine.high %v31, %v31
  %v35 = vpack.c.bf16 %v31, %v31
  %v36 = vpack.c.bf16 %v33, %v33
  %38 = vset.pattern.permute.xlu0 0
  %39 = vperm.xlu0 %38, %v26
  %v40 = vpop.permute.xlu0 %39
  %43 = vset.pattern.permute.xlu0 0
  %44 = vperm.xlu0 %43, %v27
  %v45 = vpop.permute.xlu0 %44
  %48 = vset.pattern.permute.xlu0 0
  %49 = vperm.xlu0 %48, %v28
  %v50 = vpop.permute.xlu0 %49
  %53 = vset.pattern.permute.xlu0 0
  %54 = vperm.xlu0 %53, %v29
  %v55 = vpop.permute.xlu0 %54
  %v61 = vunpack.c.l.b16 %v21
  %v62 = vunpack.c.l.b16 %v22
  %v63 = vunpack.c.l.b16 %v23
  %v64 = vunpack.c.l.b16 %v24
  %v65 = vpack.c.b16 %v62, %v61
  %v66 = vpack.c.b16 %v64, %v63
  %vm67 = vcmask 31744
  %v69 = vsel %vm67, %v65, 0
  %v72 = vsel %vm67, %v66, 0
  %vm74 = vcmask 1041408
  %v76 = vsel %vm74, %v35, 0
  %v79 = vsel %vm74, %v36, 0
  %81 = vmatprep.subr.bf16.mxu0 %v79
  %82 = vmatpush1.bf16.msra.mxu0 %v76
  %83 = vmatprep.subr.bf16.mxu0 0
  %84 = vmatpush1.bf16.msra.mxu0 0
  %85 = vmatprep.subr.bf16.mxu0 0
  %86 = vmatpush1.bf16.msra.mxu0 0
  %87 = vmatprep.subr.bf16.mxu0 0
  %88 = vmatpush1.bf16.msra.mxu0 0
  %89 = vmatprep.subr.bf16.mxu0 0
  %90 = vmatpush1.bf16.msra.mxu0 0
  %91 = vmatprep.subr.bf16.mxu0 0
  %92 = vmatpush1.bf16.msra.mxu0 0
  %93 = vmatprep.subr.bf16.mxu0 0
  %94 = vmatpush1.bf16.msra.mxu0 0
  %95 = vmatprep.subr.bf16.mxu0 0
  %96 = vmatpush1.bf16.msra.mxu0 0
  %97 = vmatprep.subr.bf16.mxu0 0
  %98 = vmatpush1.bf16.msra.mxu0 0
  %99 = vmatprep.subr.bf16.mxu0 0
  %100 = vmatpush1.bf16.msra.mxu0 0
  %101 = vmatprep.subr.bf16.mxu0 0
  %102 = vmatpush1.bf16.msra.mxu0 0
  %103 = vmatprep.subr.bf16.mxu0 0
  %104 = vmatpush1.bf16.msra.mxu0 0
  %105 = vmatprep.subr.bf16.mxu0 0
  %106 = vmatpush1.bf16.msra.mxu0 0
  %107 = vmatprep.subr.bf16.mxu0 0
  %108 = vmatpush1.bf16.msra.mxu0 0
  %109 = vmatprep.subr.bf16.mxu0 0
  %110 = vmatpush1.bf16.msra.mxu0 0
  %111 = vmatprep.subr.bf16.mxu0 0
  %112 = vmatpush1.bf16.msra.mxu0 0
  %113 = vmatprep.mubr.bf16.mxu0 0
  %114 = vmatmul.mubr.bf16.gmra.mrb[0].mxu0 %v69
  %v115 = vpop.f32.mrb[0].mxu0
  %v116 = vadd.f32 %v40, %v115
  %v117 = vpop.f32.mrb[0].mxu0
  %v118 = vadd.f32 %v40, %v117
  %v119 = vpop.f32.mrb[0].mxu0
  %v120 = vadd.f32 %v45, %v119
  %v121 = vpop.f32.mrb[0].mxu0
  %v122 = vadd.f32 %v45, %v121
  %123 = vmatprep.mubr.bf16.mxu0 0
  %124 = vmatmul.mubr.bf16.gmra.mrb[0].mxu0 %v72
  %v125 = vpop.f32.mrb[0].mxu0
  %v126 = vadd.f32 %v50, %v125
  %v127 = vpop.f32.mrb[0].mxu0
  %v128 = vadd.f32 %v50, %v127
  %v129 = vpop.f32.mrb[0].mxu0
  %v130 = vadd.f32 %v55, %v129
  %v131 = vpop.f32.mrb[0].mxu0
  %v132 = vadd.f32 %v55, %v131
  %133 = vdwg.mxu0
  %v134 = vmax.f32 %v116, 0.0
  %v135 = vmax.f32 %v118, 0.0
  %v136 = vmax.f32 %v120, 0.0
  %v137 = vmax.f32 %v122, 0.0
  %v138 = vmax.f32 %v126, 0.0
  %v139 = vmax.f32 %v128, 0.0
  %v140 = vmax.f32 %v130, 0.0
  %v141 = vmax.f32 %v132, 0.0
  %v142 = vpack.c.bf16 %v136, %v134
  %v143 = vpack.c.bf16 %v137, %v135
  %v144 = vpack.c.bf16 %v140, %v138
  %v145 = vpack.c.bf16 %v141, %v139
  %147 = vset.pattern.permute.xlu0 0
  %148 = vperm.xlu0 %147, %v30
  %v149 = vpop.permute.xlu0 %148
  %vm151 = vcmask 261120
  %v153 = vsel %vm151, %v25, 0
  %155 = vmatprep.subr.bf16.mxu0 %v143
  %156 = vmatpush1.bf16.msra.mxu0 %v142
  %157 = vmatprep.subr.bf16.mxu0 %v145
  %158 = vmatpush1.bf16.msra.mxu0 %v144
  %159 = vmatprep.subr.bf16.mxu0 0
  %160 = vmatpush1.bf16.msra.mxu0 0
  %161 = vmatprep.subr.bf16.mxu0 0
  %162 = vmatpush1.bf16.msra.mxu0 0
  %163 = vmatprep.subr.bf16.mxu0 0
  %164 = vmatpush1.bf16.msra.mxu0 0
  %165 = vmatprep.subr.bf16.mxu0 0
  %166 = vmatpush1.bf16.msra.mxu0 0
  %167 = vmatprep.subr.bf16.mxu0 0
  %168 = vmatpush1.bf16.msra.mxu0 0
  %169 = vmatprep.subr.bf16.mxu0 0
  %170 = vmatpush1.bf16.msra.mxu0 0
  %171 = vmatprep.subr.bf16.mxu0 0
  %172 = vmatpush1.bf16.msra.mxu0 0
  %173 = vmatprep.subr.bf16.mxu0 0
  %174 = vmatpush1.bf16.msra.mxu0 0
  %175 = vmatprep.subr.bf16.mxu0 0
  %176 = vmatpush1.bf16.msra.mxu0 0
  %177 = vmatprep.subr.bf16.mxu0 0
  %178 = vmatpush1.bf16.msra.mxu0 0
  %179 = vmatprep.subr.bf16.mxu0 0
  %180 = vmatpush1.bf16.msra.mxu0 0
  %181 = vmatprep.subr.bf16.mxu0 0
  %182 = vmatpush1.bf16.msra.mxu0 0
  %183 = vmatprep.subr.bf16.mxu0 0
  %184 = vmatpush1.bf16.msra.mxu0 0
  %185 = vmatprep.subr.bf16.mxu0 0
  %186 = vmatpush1.bf16.msra.mxu0 0
  %187 = vmatprep.mubr.bf16.mxu0 0
  %188 = vmatmul.mubr.bf16.gmra.mrb[0].mxu0 %v153
  %v189 = vpop.f32.mrb[0].mxu0
  %v190 = vadd.f32 %v149, %v189
  %v191 = vpop.f32.mrb[0].mxu0
  %v192 = vadd.f32 %v149, %v191
  %v193 = vpop.f32.mrb[0].mxu0
  %v194 = vpop.f32.mrb[0].mxu0
  %195 = vdwg.mxu0
  %v198 = vcombine.low %v190, %v192
  %200 = vst [vmem:[%s5] sm:$0xff] %v198
  %s201 = scalar_lea.vmem %s0, 8
  %v202 = vld [vmem:[%s201] sm:$0xff]
  %v204 = vcombine.high %v202, %v202
  %v206 = vpack.c.bf16 %v202, %v202
  %v207 = vpack.c.bf16 %v204, %v204
  %v209 = vsel %vm74, %v206, 0
  %v212 = vsel %vm74, %v207, 0
  %214 = vmatprep.subr.bf16.mxu0 %v212
  %215 = vmatpush1.bf16.msra.mxu0 %v209
  %216 = vmatprep.subr.bf16.mxu0 0
  %217 = vmatpush1.bf16.msra.mxu0 0
  %218 = vmatprep.subr.bf16.mxu0 0
  %219 = vmatpush1.bf16.msra.mxu0 0
  %220 = vmatprep.subr.bf16.mxu0 0
  %221 = vmatpush1.bf16.msra.mxu0 0
  %222 = vmatprep.subr.bf16.mxu0 0
  %223 = vmatpush1.bf16.msra.mxu0 0
  %224 = vmatprep.subr.bf16.mxu0 0
  %225 = vmatpush1.bf16.msra.mxu0 0
  %226 = vmatprep.subr.bf16.mxu0 0
  %227 = vmatpush1.bf16.msra.mxu0 0
  %228 = vmatprep.subr.bf16.mxu0 0
  %229 = vmatpush1.bf16.msra.mxu0 0
  %230 = vmatprep.subr.bf16.mxu0 0
  %231 = vmatpush1.bf16.msra.mxu0 0
  %232 = vmatprep.subr.bf16.mxu0 0
  %233 = vmatpush1.bf16.msra.mxu0 0
  %234 = vmatprep.subr.bf16.mxu0 0
  %235 = vmatpush1.bf16.msra.mxu0 0
  %236 = vmatprep.subr.bf16.mxu0 0
  %237 = vmatpush1.bf16.msra.mxu0 0
  %238 = vmatprep.subr.bf16.mxu0 0
  %239 = vmatpush1.bf16.msra.mxu0 0
  %240 = vmatprep.subr.bf16.mxu0 0
  %241 = vmatpush1.bf16.msra.mxu0 0
  %242 = vmatprep.subr.bf16.mxu0 0
  %243 = vmatpush1.bf16.msra.mxu0 0
  %244 = vmatprep.subr.bf16.mxu0 0
  %245 = vmatpush1.bf16.msra.mxu0 0
  %246 = vmatprep.mubr.bf16.mxu0 0
  %247 = vmatmul.mubr.bf16.gmra.mrb[0].mxu0 %v69
  %v248 = vpop.f32.mrb[0].mxu0
  %v249 = vadd.f32 %v40, %v248
  %v250 = vpop.f32.mrb[0].mxu0
  %v251 = vadd.f32 %v40, %v250
  %v252 = vpop.f32.mrb[0].mxu0
  %v253 = vadd.f32 %v45, %v252
  %v254 = vpop.f32.mrb[0].mxu0
  %v255 = vadd.f32 %v45, %v254
  %256 = vmatprep.mubr.bf16.mxu0 0
  %257 = vmatmul.mubr.bf16.gmra.mrb[0].mxu0 %v72
  %v258 = vpop.f32.mrb[0].mxu0
  %v259 = vadd.f32 %v50, %v258
  %v260 = vpop.f32.mrb[0].mxu0
  %v261 = vadd.f32 %v50, %v260
  %v262 = vpop.f32.mrb[0].mxu0
  %v263 = vadd.f32 %v55, %v262
  %v264 = vpop.f32.mrb[0].mxu0
  %v265 = vadd.f32 %v55, %v264
  %266 = vdwg.mxu0
  %v267 = vmax.f32 %v249, 0.0
  %v268 = vmax.f32 %v251, 0.0
  %v269 = vmax.f32 %v253, 0.0
  %v270 = vmax.f32 %v255, 0.0
  %v271 = vmax.f32 %v259, 0.0
  %v272 = vmax.f32 %v261, 0.0
  %v273 = vmax.f32 %v263, 0.0
  %v274 = vmax.f32 %v265, 0.0
  %v275 = vpack.c.bf16 %v269, %v267
  %v276 = vpack.c.bf16 %v270, %v268
  %v277 = vpack.c.bf16 %v273, %v271
  %v278 = vpack.c.bf16 %v274, %v272
  %279 = vmatprep.subr.bf16.mxu0 %v276
  %280 = vmatpush1.bf16.msra.mxu0 %v275
  %281 = vmatprep.subr.bf16.mxu0 %v278
  %282 = vmatpush1.bf16.msra.mxu0 %v277
  %283 = vmatprep.subr.bf16.mxu0 0
  %284 = vmatpush1.bf16.msra.mxu0 0
  %285 = vmatprep.subr.bf16.mxu0 0
  %286 = vmatpush1.bf16.msra.mxu0 0
  %287 = vmatprep.subr.bf16.mxu0 0
  %288 = vmatpush1.bf16.msra.mxu0 0
  %289 = vmatprep.subr.bf16.mxu0 0
  %290 = vmatpush1.bf16.msra.mxu0 0
  %291 = vmatprep.subr.bf16.mxu0 0
  %292 = vmatpush1.bf16.msra.mxu0 0
  %293 = vmatprep.subr.bf16.mxu0 0
  %294 = vmatpush1.bf16.msra.mxu0 0
  %295 = vmatprep.subr.bf16.mxu0 0
  %296 = vmatpush1.bf16.msra.mxu0 0
  %297 = vmatprep.subr.bf16.mxu0 0
  %298 = vmatpush1.bf16.msra.mxu0 0
  %299 = vmatprep.subr.bf16.mxu0 0
  %300 = vmatpush1.bf16.msra.mxu0 0
  %301 = vmatprep.subr.bf16.mxu0 0
  %302 = vmatpush1.bf16.msra.mxu0 0
  %303 = vmatprep.subr.bf16.mxu0 0
  %304 = vmatpush1.bf16.msra.mxu0 0
  %305 = vmatprep.subr.bf16.mxu0 0
  %306 = vmatpush1.bf16.msra.mxu0 0
  %307 = vmatprep.subr.bf16.mxu0 0
  %308 = vmatpush1.bf16.msra.mxu0 0
  %309 = vmatprep.subr.bf16.mxu0 0
  %310 = vmatpush1.bf16.msra.mxu0 0
  %311 = vmatprep.mubr.bf16.mxu0 0
  %312 = vmatmul.mubr.bf16.gmra.mrb[0].mxu0 %v153
  %v313 = vpop.f32.mrb[0].mxu0
  %v314 = vadd.f32 %v149, %v313
  %v315 = vpop.f32.mrb[0].mxu0
  %v316 = vadd.f32 %v149, %v315
  %v317 = vpop.f32.mrb[0].mxu0
  %v318 = vpop.f32.mrb[0].mxu0
  %319 = vdwg.mxu0
  %v322 = vcombine.low %v314, %v316
  %s324 = scalar_lea.vmem %s5, 8
  %325 = vst [vmem:[%s324] sm:$0xff] %v322
  // Predicated region
  $region22: #{group_conv_mlp_forward.1} parent=0 // pred_check
    _
  $region23: #{group_conv_mlp_forward.1} parent=0 // pred_check_branch
    %327 = sbr.rel (0) target = $region25
  $region24: #{group_conv_mlp_forward.1} parent=0 // pred_region
    _
  $region25: #{group_conv_mlp_forward.1} parent=0 // pred_fallthru
    _
  // Predicated region
  $region26: #{group_conv_mlp_forward.1} parent=0 // pred_check
    _
  $region27: #{group_conv_mlp_forward.1} parent=0 // pred_check_branch
    %329 = sbr.rel (0) target = $region29
  $region28: #{group_conv_mlp_forward.1} parent=0 // pred_region
    _
  $region29: #{group_conv_mlp_forward.1} parent=0 // pred_fallthru
    _

</llo_original>
